<compile_context>
chip_gen: v7x
topology: tpu7x:2x2x1
jax: 0.10.0
libtpu: 0.0.40
codegen_flags: <defaults>
</compile_context>

<pallas_src>
import jax
import jax.numpy as jnp
from jax.experimental import pallas as pl
from jax.experimental.pallas import tpu as pltpu


def _round_up(n, m):
    return ((n + m - 1) // m) * m


# ---------------------------------------------------------------------------
# Kernel bodies (compute_dtype is a trace-time closure; cast of x is in-kernel)
# ---------------------------------------------------------------------------
def _make_kernels(compute_dtype):
    def _cast(v):
        return v if compute_dtype is None else v.astype(compute_dtype)

    def kernel_single(x_ref, w_ref, o_ref):
        # gk == 1: single dot, no accumulator scratch, no zero-init pass.
        o_ref[...] = jnp.dot(
            _cast(x_ref[...]), w_ref[...], preferred_element_type=jnp.float32
        ).astype(o_ref.dtype)

    def kernel_acc_inplace(x_ref, w_ref, o_ref):
        # gk > 1, f32 output: accumulate directly into the resident out block.
        @pl.when(pl.program_id(2) == 0)
        def _init():
            o_ref[...] = jnp.zeros_like(o_ref)

        o_ref[...] += jnp.dot(
            _cast(x_ref[...]), w_ref[...], preferred_element_type=jnp.float32
        )

    def kernel_acc_scratch(x_ref, w_ref, o_ref, acc_ref):
        # gk > 1, non-f32 output: f32 VMEM accumulator, cast on the last step.
        @pl.when(pl.program_id(2) == 0)
        def _init():
            acc_ref[...] = jnp.zeros_like(acc_ref)

        acc_ref[...] += jnp.dot(
            _cast(x_ref[...]), w_ref[...], preferred_element_type=jnp.float32
        )

        @pl.when(pl.program_id(2) == pl.num_programs(2) - 1)
        def _store():
            o_ref[...] = acc_ref[...].astype(o_ref.dtype)

    return kernel_single, kernel_acc_inplace, kernel_acc_scratch


# ---------------------------------------------------------------------------
# Tile-size / VMEM policy
# ---------------------------------------------------------------------------
def _select_tk(h1, tk):
    """K tile: must divide h1 exactly (contraction) or be the full extent."""
    tk = max(128, (tk // 128) * 128)
    if h1 <= tk:
        return h1                       # full-extent K block (always legal)
    if h1 % 128 == 0:
        for cand in range(tk, 127, -128):
            if h1 % cand == 0:
                return cand             # largest 128-multiple divisor of h1
    # TODO(synk): for very large ragged h1, zero-pad the K axis instead of
    # falling back to a single full-extent K block.
    return h1


def _select_tn(h2, tn):
    """N tile: 128-multiple (ragged tail is masked) or the full extent."""
    tn = max(128, (tn // 128) * 128)
    return h2 if h2 <= tn else tn


def _vmem_budget_bytes():
    cap = None
    try:
        cap = getattr(pltpu.get_tpu_info(), "vmem_capacity_bytes", None)
    except Exception:
        cap = None
    if not cap:
        cap = 64 * 1024 * 1024          # conservative fallback (v7x per-TC)
    return int(cap) * 3 // 4            # leave headroom for compiler scratch


def _fit_tiles(TM, TN, TK, x_bytes, w_bytes, o_bytes, needs_scratch, budget,
               m_align):
    def footprint(tm, tn):
        f = (2 * tm * TK * x_bytes      # x tile, double-buffered
             + 2 * TK * tn * w_bytes    # W tile, double-buffered
             + 2 * tm * tn * o_bytes)   # out tile, double-buffered
        if needs_scratch:
            f += tm * tn * 4            # f32 accumulator scratch
        return f

    while footprint(TM, TN) > budget:
        if TM > 256:                    # prefer shrinking the row tile first
            TM = max(256, _round_up(TM // 2, m_align))
        elif TN > 256:
            TN = max(128, ((TN // 2) // 128) * 128)
        else:
            break
    return TM, TN


# ---------------------------------------------------------------------------
# Forward wrapper: y = matmul(x, weights)
# ---------------------------------------------------------------------------
def debias_forward(x, weights, *, compute_dtype=None, tm=1024, tn=512, tk=512):
    """y = matmul(x, weights); x: (..., h1), weights: (h1, h2) -> (..., h2)."""
    h1, h2 = weights.shape
    assert x.shape[-1] == h1, (x.shape, weights.shape)
    out_dtype = x.dtype
    lead_shape = x.shape[:-1]

    # Only the small, reused W is pre-cast in the wrapper; x is cast inside
    # the kernel (free VPU op) to avoid an extra HBM read+write pass over x.
    if compute_dtype is not None:
        weights = weights.astype(compute_dtype)

    x2d = x.reshape(-1, h1)             # glue: flatten leading (batch) dims
    M = x2d.shape[0]

    x_bytes = x2d.dtype.itemsize
    w_bytes = weights.dtype.itemsize
    o_bytes = jnp.dtype(out_dtype).itemsize

    # dtype-aware sublane alignment for the M tile (f32: 8, bf16: 16, 8-bit: 32)
    m_align = {4: 8, 2: 16, 1: 32}.get(x_bytes, 8)

    TM = _round_up(min(max(tm, m_align), _round_up(M, m_align)), m_align)
    TK = _select_tk(h1, tk)
    TN = _select_tn(h2, tn)

    gk = pl.cdiv(h1, TK)                # exact: TK divides h1 or TK == h1
    needs_scratch = (gk > 1) and (jnp.dtype(out_dtype) != jnp.float32)

    budget = _vmem_budget_bytes()
    TM, TN = _fit_tiles(TM, TN, TK, x_bytes, w_bytes, o_bytes, needs_scratch,
                        budget, m_align)

    gm = pl.cdiv(M, TM)                 # partial boundary blocks are masked
    gn = pl.cdiv(h2, TN)

    k_single, k_inplace, k_scratch = _make_kernels(compute_dtype)
    if gk == 1:
        kernel, scratch_shapes = k_single, ()
    elif not needs_scratch:
        kernel, scratch_shapes = k_inplace, ()
    else:
        kernel, scratch_shapes = k_scratch, (pltpu.VMEM((TM, TN), jnp.float32),)

    # HBM traffic: x is re-streamed once per N tile, W once per M tile.
    cost = pl.CostEstimate(
        flops=2 * M * h1 * h2,
        transcendentals=0,
        bytes_accessed=(gn * M * h1 * x_bytes
                        + gm * h1 * h2 * w_bytes
                        + M * h2 * o_bytes),
    )

    # TODO(synk): when gn == gk == 1, W's block index is constant for the whole
    # grid; single-buffering it (pipeline_mode=pl.Buffered(1)) would halve its
    # VMEM share — left out to keep this version maximally portable.
    out2d = pl.pallas_call(
        kernel,
        out_shape=jax.ShapeDtypeStruct((M, h2), out_dtype),
        grid=(gm, gn, gk),
        in_specs=[
            pl.BlockSpec((TM, TK), lambda i, j, k: (i, k)),
            pl.BlockSpec((TK, TN), lambda i, j, k: (k, j)),
        ],
        out_specs=pl.BlockSpec((TM, TN), lambda i, j, k: (i, j)),
        scratch_shapes=scratch_shapes,
        compiler_params=pltpu.CompilerParams(
            # M and N tiles are independent (megacore-shardable on v7x); the
            # contraction axis carries the accumulator, so it is "arbitrary".
            dimension_semantics=("parallel", "parallel", "arbitrary"),
            vmem_limit_bytes=int(budget),
        ),
        cost_estimate=cost,
    )(x2d, weights)

    return out2d.reshape(*lead_shape, h2)


if __name__ == "__main__":
    key = jax.random.PRNGKey(0)
    kx, kw, kx3, kw3, kx4, kw4 = jax.random.split(key, 6)

    # --- 1) Small case matching the module: x (batch, seq, h1), W (h1, h2).
    batch, seq, h1, h2 = 2, 8, 32, 32
    x = jax.random.normal(kx, (batch, seq, h1), dtype=jnp.float32)
    # Parameter init mirrors the module: xavier_uniform_ over an (h1, h2) weight.
    bound = (6.0 / (h1 + h2)) ** 0.5
    w = jax.random.uniform(kw, (h1, h2), dtype=jnp.float32,
                           minval=-bound, maxval=bound)
    out = jax.block_until_ready(debias_forward(x, w))
    ref = jnp.matmul(x, w)
    assert out.shape == (batch, seq, h2)
    # Tolerance accommodates the MXU's bf16-based default f32 matmul precision
    # (present in both the kernel and the XLA reference).
    assert jnp.allclose(out, ref, atol=1e-2, rtol=1e-2)

    # --- 2) bf16 compute path (MXU-native): x cast in-kernel, f32 accumulation.
    out_bf16 = jax.block_until_ready(
        debias_forward(x, w, compute_dtype=jnp.bfloat16))
    assert out_bf16.shape == (batch, seq, h2)
    assert jnp.allclose(out_bf16, ref, atol=5e-2, rtol=5e-2)

    # --- 3) M/N/K tiling with a partial (masked) last M block and in-place
    #        f32 accumulation across the K grid axis (no scratch buffer).
    B3, S3, H1b, H2b = 3, 100, 512, 384
    xb = jax.random.normal(kx3, (B3, S3, H1b), dtype=jnp.float32)
    bndb = (6.0 / (H1b + H2b)) ** 0.5
    wb = jax.random.uniform(kw3, (H1b, H2b), dtype=jnp.float32,
                            minval=-bndb, maxval=bndb)
    outb = jax.block_until_ready(
        debias_forward(xb, wb, tm=256, tn=128, tk=128))
    refb = jnp.matmul(xb, wb)
    assert outb.shape == (B3, S3, H2b)
    assert jnp.allclose(outb, refb, atol=5e-2, rtol=5e-2)

    # --- 4) bf16 storage dtype with K-tiled f32 scratch accumulation path.
    B4, S4, H1c, H2c = 2, 64, 512, 256
    xc = jax.random.normal(kx4, (B4, S4, H1c), dtype=jnp.bfloat16)
    bndc = (6.0 / (H1c + H2c)) ** 0.5
    wc = jax.random.uniform(kw4, (H1c, H2c), dtype=jnp.float32,
                            minval=-bndc, maxval=bndc)
    outc = jax.block_until_ready(
        debias_forward(xc, wc, compute_dtype=jnp.bfloat16,
                       tm=128, tn=128, tk=128))
    refc = jnp.matmul(xc.astype(jnp.float32), wc)
    assert outc.shape == (B4, S4, H2c)
    assert jnp.allclose(outc.astype(jnp.float32), refc, atol=1e-1, rtol=1e-1)

    print("KERNEL_OK")
</pallas_src>

<mosaic_0001>
module attributes {stable_mosaic.version = 11 : i64} {
  func.func @kernel_single(%arg0: i32, %arg1: i32, %arg2: i32, %arg3: memref<16x32xf32, #tpu.memory_space<vmem>>, %arg4: memref<32x32xf32, #tpu.memory_space<vmem>>, %arg5: memref<16x32xf32, #tpu.memory_space<vmem>>) attributes {dimension_semantics = [#tpu.dimension_semantics<parallel>, #tpu.dimension_semantics<parallel>, #tpu.dimension_semantics<arbitrary>], iteration_bounds = array<i64: 1, 1, 1>, scalar_prefetch = 0 : i64, scratch_operands = 0 : i64, tpu.core_type = #tpu.core_type<tc>, window_params = [{transform_indices = @transform_0, window_bounds = array<i64: 16, 32>}, {transform_indices = @transform_1, window_bounds = array<i64: 32, 32>}, {transform_indices = @transform_2, window_bounds = array<i64: 16, 32>}]} {
    %c0 = arith.constant 0 : index
    %c0_0 = arith.constant 0 : index
    %0 = vector.load %arg3[%c0, %c0_0] : memref<16x32xf32, #tpu.memory_space<vmem>>, vector<16x32xf32>
    %c0_1 = arith.constant 0 : index
    %c0_2 = arith.constant 0 : index
    %1 = vector.load %arg4[%c0_1, %c0_2] : memref<32x32xf32, #tpu.memory_space<vmem>>, vector<32x32xf32>
    %cst = arith.constant dense<0.000000e+00> : vector<16x32xf32>
    %2 = tpu.matmul %0, %1, %cst {dimension_numbers = #tpu.dot_dimension_numbers<[1], [0], [0], [1], [0, 0, 1, 1], [], []>} : vector<16x32xf32>, vector<32x32xf32>, vector<16x32xf32> -> vector<16x32xf32>
    %c0_3 = arith.constant 0 : index
    %c0_4 = arith.constant 0 : index
    %3 = vector.load %arg5[%c0_3, %c0_4] : memref<16x32xf32, #tpu.memory_space<vmem>>, vector<16x32xf32>
    tpu.vector_store %arg5[%c0_3, %c0_4], %2 {strides = array<i32>} : memref<16x32xf32, #tpu.memory_space<vmem>>, vector<16x32xf32>,
    return
  }
  func.func @transform_0(%arg0: i32, %arg1: i32, %arg2: i32) -> (i32, i32) {
    %c0_i32 = arith.constant 0 : i32
    return %arg0, %arg2 : i32, i32
  }
  func.func @transform_1(%arg0: i32, %arg1: i32, %arg2: i32) -> (i32, i32) {
    %c0_i32 = arith.constant 0 : i32
    return %arg2, %arg1 : i32, i32
  }
  func.func @transform_2(%arg0: i32, %arg1: i32, %arg2: i32) -> (i32, i32) {
    %c0_i32 = arith.constant 0 : i32
    return %arg0, %arg1 : i32, i32
  }
}

</mosaic_0001>

<llo_original>
// kernel: tpu_custom_call.1
$region0: #{tpu_custom_call.1}
  #allocation0 [shape = 'u32[]', space=smem, size = 0x4, offset = 0x4, fixed_abs, tag = 'smem constant byte address 0x4 - core index']
  #allocation1 [shape = 'u32[144,128]{1,0:T(1,128)}', space=vmem, size = 0x12000, scoped, tag = 'internal scratch']
  %s0 = inlined_call_operand.hbm [shape: f32[16,32], index: 0, kind: input, shape index: {}]
  %s1 = inlined_call_operand.hbm [shape: f32[32,32], index: 1, kind: input, shape index: {}]
  %s2 = inlined_call_operand.hbm [shape: f32[16,32], index: 2, kind: output, shape index: {}]
  %s3 = sld [smem:[#allocation0]]
  $region26: #{tpu_custom_call.1} parent=0
    _
  %s5 = ssub.s32 1, %s3
  %s6 = scalar_select 0, %s5, %s3
  $region1: #{tpu_custom_call.1} parent=0
    #allocation2 [shape = 'u8[8192]{0}', space=vmem, size = 0x2000, scoped, tag = 'input window, operand 0, single buffered']
    #allocation3 [shape = 's32[1]{0}', space=sflag, size = 0x4, scoped, tag = 'scoped memory for tpu_custom_call.1']
    #allocation4 [shape = 's32[1]{0}', space=sflag, size = 0x4, scoped, tag = 'scoped memory for tpu_custom_call.1']
    #allocation5 [shape = 'u8[16384]{0}', space=vmem, size = 0x4000, scoped, tag = 'input window, operand 1, single buffered']
    #allocation6 [shape = 's32[1]{0}', space=sflag, size = 0x4, scoped, tag = 'scoped memory for tpu_custom_call.1']
    #allocation7 [shape = 'u8[8192]{0}', space=vmem, size = 0x2000, scoped, tag = 'output window, operand 0, single buffered']
    %7 = vsyncpa [#allocation3], 0
    %8 = vsyncpa [#allocation6], 0
    %9 = vsyncpa [#allocation4], 0
    // Predicated region
    $region2: #{tpu_custom_call.1} parent=1 // pred_check
      _
    $region3: #{tpu_custom_call.1} parent=1 // pred_check_branch
      %11 = sbr.rel (0) target = $region5
    $region4: #{tpu_custom_call.1} parent=1 // pred_region
      %s13 = ssub.s32 256, 256
      %14 = vsyncadd [#allocation3], %s13
      %s15 = sshll.u32 [#allocation2], 4
      %s16 = int_to_ptr.vmem [resolvable:$true] %s15
      %21 = dma.hbm_to_vmem [thread:$0]  %s0, 256, %s16, [#allocation3], 128, 128, 8
    $region5: #{tpu_custom_call.1} parent=1 // pred_fallthru
      _
    // Predicated region
    $region6: #{tpu_custom_call.1} parent=1 // pred_check
      _
    $region7: #{tpu_custom_call.1} parent=1 // pred_check_branch
      %23 = sbr.rel (0) target = $region9
    $region8: #{tpu_custom_call.1} parent=1 // pred_region
      %s25 = ssub.s32 512, 512
      %26 = vsyncadd [#allocation6], %s25
      %s27 = sshll.u32 [#allocation5], 4
      %s28 = int_to_ptr.vmem [resolvable:$true] %s27
      %33 = dma.hbm_to_vmem [thread:$0]  %s1, 512, %s28, [#allocation6], 128, 128, 8
    $region9: #{tpu_custom_call.1} parent=1 // pred_fallthru
      _
    // Predicated region
    $region10: #{tpu_custom_call.1} parent=1 // pred_check
      _
    $region11: #{tpu_custom_call.1} parent=1 // pred_check_branch
      %35 = sbr.rel (0) target = $region13
    $region12: #{tpu_custom_call.1} parent=1 // pred_region
      %36 = dma.done [#allocation3], 256
    $region13: #{tpu_custom_call.1} parent=1 // pred_fallthru
      _
    // Predicated region
    $region14: #{tpu_custom_call.1} parent=1 // pred_check
      _
    $region15: #{tpu_custom_call.1} parent=1 // pred_check_branch
      %38 = sbr.rel (0) target = $region17
    $region16: #{tpu_custom_call.1} parent=1 // pred_region
      %39 = dma.done [#allocation6], 512
    $region17: #{tpu_custom_call.1} parent=1 // pred_fallthru
      _
    %v40 = vld [vmem:[#allocation2] sm:$0xff]
    %v41 = vld [vmem:[#allocation2 + $0x8] sm:$0xff]
    %v42 = vld [vmem:[#allocation5] sm:$0xff]
    %v43 = vld [vmem:[#allocation5 + $0x8] sm:$0xff]
    %v44 = vld [vmem:[#allocation5 + $0x10] sm:$0xff]
    %v45 = vld [vmem:[#allocation5 + $0x18] sm:$0xff]
    %vm46 = vcmask 261120
    %v48 = vsel %vm46, %v40, 0
    %v51 = vsel %vm46, %v41, 0
    %53 = vmatprep.subr.mxu0 0.0
    %54 = vmatpush1.msra.mxu0 %v42
    %55 = vmatprep.subr.mxu0 0.0
    %56 = vmatpush1.msra.mxu0 %v43
    %57 = vmatprep.subr.mxu0 0.0
    %58 = vmatpush1.msra.mxu0 %v44
    %59 = vmatprep.subr.mxu0 0.0
    %60 = vmatpush1.msra.mxu0 %v45
    %61 = vmatprep.subr.mxu0 0.0
    %62 = vmatpush1.msra.mxu0 0.0
    %63 = vmatprep.subr.mxu0 0.0
    %64 = vmatpush1.msra.mxu0 0.0
    %65 = vmatprep.subr.mxu0 0.0
    %66 = vmatpush1.msra.mxu0 0.0
    %67 = vmatprep.subr.mxu0 0.0
    %68 = vmatpush1.msra.mxu0 0.0
    %69 = vmatprep.subr.mxu0 0.0
    %70 = vmatpush1.msra.mxu0 0.0
    %71 = vmatprep.subr.mxu0 0.0
    %72 = vmatpush1.msra.mxu0 0.0
    %73 = vmatprep.subr.mxu0 0.0
    %74 = vmatpush1.msra.mxu0 0.0
    %75 = vmatprep.subr.mxu0 0.0
    %76 = vmatpush1.msra.mxu0 0.0
    %77 = vmatprep.subr.mxu0 0.0
    %78 = vmatpush1.msra.mxu0 0.0
    %79 = vmatprep.subr.mxu0 0.0
    %80 = vmatpush1.msra.mxu0 0.0
    %81 = vmatprep.subr.mxu0 0.0
    %82 = vmatpush1.msra.mxu0 0.0
    %83 = vmatprep.subr.mxu0 0.0
    %84 = vmatpush1.msra.mxu0 0.0
    %85 = vmatprep.subr.mxu0 0.0
    %86 = vmatpush1.msra.mxu0 0.0
    %87 = vmatprep.subr.mxu0 0.0
    %88 = vmatpush1.msra.mxu0 0.0
    %89 = vmatprep.subr.mxu0 0.0
    %90 = vmatpush1.msra.mxu0 0.0
    %91 = vmatprep.subr.mxu0 0.0
    %92 = vmatpush1.msra.mxu0 0.0
    %93 = vmatprep.subr.mxu0 0.0
    %94 = vmatpush1.msra.mxu0 0.0
    %95 = vmatprep.subr.mxu0 0.0
    %96 = vmatpush1.msra.mxu0 0.0
    %97 = vmatprep.subr.mxu0 0.0
    %98 = vmatpush1.msra.mxu0 0.0
    %99 = vmatprep.subr.mxu0 0.0
    %100 = vmatpush1.msra.mxu0 0.0
    %101 = vmatprep.subr.mxu0 0.0
    %102 = vmatpush1.msra.mxu0 0.0
    %103 = vmatprep.subr.mxu0 0.0
    %104 = vmatpush1.msra.mxu0 0.0
    %105 = vmatprep.subr.mxu0 0.0
    %106 = vmatpush1.msra.mxu0 0.0
    %107 = vmatprep.subr.mxu0 0.0
    %108 = vmatpush1.msra.mxu0 0.0
    %109 = vmatprep.subr.mxu0 0.0
    %110 = vmatpush1.msra.mxu0 0.0
    %111 = vmatprep.subr.mxu0 0.0
    %112 = vmatpush1.msra.mxu0 0.0
    %113 = vmatprep.subr.mxu0 0.0
    %114 = vmatpush1.msra.mxu0 0.0
    %115 = vmatprep.subr.mxu0 0.0
    %116 = vmatpush1.msra.mxu0 0.0
    %117 = vmatprep.mubr.f32.mxu0 0.0
    %118 = vmatmul.mubr.f32.gmra.mrb[0].mxu0 %v48
    %v119 = vpop.f32.mrb[0].mxu0
    %v120 = vadd.f32 0.0, %v119
    %v121 = vpop.f32.mrb[0].mxu0
    %122 = vmatprep.mubr.f32.mxu0 0.0
    %123 = vmatmul.mubr.f32.gmra.mrb[0].mxu0 %v51
    %v124 = vpop.f32.mrb[0].mxu0
    %v125 = vadd.f32 0.0, %v124
    %v126 = vpop.f32.mrb[0].mxu0
    %127 = vdwg.mxu0
    %128 = vst.msk [vmem:[#allocation7] sm:$0xff] %vm46, %v120
    %129 = vst.msk [vmem:[#allocation7 + $0x8] sm:$0xff] %vm46, %v125
    // Predicated region
    $region18: #{tpu_custom_call.1} parent=1 // pred_check
      _
    $region19: #{tpu_custom_call.1} parent=1 // pred_check_branch
      %131 = sbr.rel (0) target = $region21
    $region20: #{tpu_custom_call.1} parent=1 // pred_region
      %s133 = ssub.s32 256, 256
      %134 = vsyncadd [#allocation4], %s133
      %s135 = sshll.u32 [#allocation7], 4
      %s136 = int_to_ptr.vmem [resolvable:$true] %s135
      %141 = dma.vmem_to_hbm [thread:$0]  %s136, 256, %s2, [#allocation4], 128, 128, 8
    $region21: #{tpu_custom_call.1} parent=1 // pred_fallthru
      _
    // Predicated region
    $region22: #{tpu_custom_call.1} parent=1 // pred_check
      _
    $region23: #{tpu_custom_call.1} parent=1 // pred_check_branch
      %143 = sbr.rel (0) target = $region25
    $region24: #{tpu_custom_call.1} parent=1 // pred_region
      %144 = dma.done [#allocation4], 256
    $region25: #{tpu_custom_call.1} parent=1 // pred_fallthru
      _
    %145 = vsyncpa [#allocation3], 1
    %146 = vsyncpa [#allocation6], 1
    %147 = vsyncpa [#allocation4], 1

</llo_original>
